<compile_context>
chip_gen: v5e
topology: v5e:2x2
jax: 0.10.0
libtpu: 0.0.40
codegen_flags: <defaults>
</compile_context>

<pallas_src>
import jax
import jax.numpy as jnp
from jax.experimental import pallas as pl
from jax.experimental.pallas import tpu as pltpu

NEG_SLOPE = 0.01   # nn.LeakyReLU default


def _leaky_relu(x, negative_slope=NEG_SLOPE):
    return jnp.where(x > 0, x, negative_slope * x)


def _round_up(x, m):
    return ((x + m - 1) // m) * m


def base_seq_model_kernel(x_ref, w1_ref, b1_ref, w2_ref, b2_ref, out_ref):
    # Cast x to bf16 in-kernel (no extra wrapper pass over HBM).
    xb = x_ref[...].astype(jnp.bfloat16)

    # TODO(synk): seq_to_seq is abstract (NotImplementedError) in BaseSeqModel;
    # identity pass-through is assumed, which is what makes folding
    # seq_input_proj into the first decoder layer (w1_ref) exact.

    # Folded (input_proj + fused first decoder layer), f32 MXU accumulation.
    z = jnp.dot(xb, w1_ref[...], preferred_element_type=jnp.float32) + b1_ref[...]
    z = _leaky_relu(z)                      # Dropout(0.2) = identity (eval mode)

    # Fused second decoder layer: block-diagonal [W_s2 ; W_a2] padded to a
    # lane-dense OUT_PAD-wide slab -> single unmasked bf16 store.
    y = jnp.dot(z.astype(jnp.bfloat16), w2_ref[...],
                preferred_element_type=jnp.float32) + b2_ref[...]
    out_ref[...] = y.astype(out_ref.dtype)


def init_params(key, input_size, hidden_size, output_size):
    """Deterministic synthetic parameters, stored transposed to (in, out)."""
    mid_s = (hidden_size + output_size) // 2
    mid_a = hidden_size // 2
    shapes = {
        "w_in": (input_size, hidden_size), "b_in": (1, hidden_size),
        "w_s1": (hidden_size, mid_s),      "b_s1": (1, mid_s),
        "w_s2": (mid_s, output_size),      "b_s2": (1, output_size),
        "w_a1": (hidden_size, mid_a),      "b_a1": (1, mid_a),
        "w_a2": (mid_a, 2),                "b_a2": (1, 2),
    }
    params = {}
    keys = jax.random.split(key, len(shapes))
    for k_rng, (name, shp) in zip(keys, shapes.items()):
        fan_in = shp[0] if name.startswith("w") else shp[1]
        scale = 1.0 / jnp.sqrt(jnp.float32(fan_in))
        params[name] = (jax.random.normal(k_rng, shp, jnp.float32) * scale)
    return params


def _vmem_limit_bytes(tile_m, input_size, mid_cat, out_pad, weight_bytes):
    foot = 2 * tile_m * input_size * 4        # double-buffered f32 x tile
    foot += 2 * tile_m * out_pad * 2          # double-buffered bf16 out tile
    foot += 2 * weight_bytes                  # (double-buffered) resident weights
    foot += tile_m * (mid_cat + out_pad) * 4  # f32 intermediates
    foot += tile_m * (input_size + mid_cat) * 2   # bf16 casts
    limit = 2 * foot                          # headroom
    cap = 32 << 20                            # safe on v7x's 64 MiB VMEM
    try:
        info = pltpu.get_tpu_info()
        vmem = getattr(info, "vmem_capacity_bytes", None)
        if vmem:
            cap = int(vmem) // 2
    except Exception:
        pass
    return int(min(max(limit, 8 << 20), cap))


def base_seq_model_forward(x, params, output_size, tile_m_target=2048):
    B, S, input_size = x.shape
    hidden = params["w_in"].shape[1]
    mid_s = params["w_s1"].shape[1]
    mid_a = params["w_a1"].shape[1]
    mid_cat = mid_s + mid_a
    out_pad = _round_up(output_size + 2, 128)   # lane-dense fused output width

    M = B * S
    # Big tiles amortize per-step overhead, but guarantee >= 2 grid steps when
    # M > 8 so megacore (v7x) gets both TensorCores busy.
    tile_m = max(8, min(tile_m_target, _round_up(pl.cdiv(M, 2), 8)))
    grid = (pl.cdiv(M, tile_m),)

    bf16 = jnp.bfloat16
    x2d = x.reshape(M, input_size)              # free reshape, stays f32

    # --- fold input projection into the fused first decoder layer (wrapper-side,
    #     f32 math, single bf16 cast) --------------------------------------
    w1cat = jnp.concatenate([params["w_s1"], params["w_a1"]], axis=1)     # (hidden, mid_cat)
    b1cat = jnp.concatenate([params["b_s1"], params["b_a1"]], axis=1)     # (1, mid_cat)
    w_fold = (params["w_in"] @ w1cat).astype(bf16)                        # (input_size, mid_cat)
    b_fold = (params["b_in"] @ w1cat + b1cat).astype(jnp.float32)         # (1, mid_cat)

    # --- block-diagonal fused second layer, padded to out_pad lanes -------
    w2 = jnp.zeros((mid_cat, out_pad), jnp.float32)
    w2 = w2.at[:mid_s, :output_size].set(params["w_s2"])
    w2 = w2.at[mid_s:, output_size:output_size + 2].set(params["w_a2"])
    w2 = w2.astype(bf16)
    b2 = jnp.zeros((1, out_pad), jnp.float32)
    b2 = b2.at[:, :output_size].set(params["b_s2"][0])
    b2 = b2.at[:, output_size:output_size + 2].set(params["b_a2"][0])

    weight_bytes = (w_fold.size + w2.size) * 2 + (b_fold.size + b2.size) * 4

    def resident(shape):
        # Same block every grid step -> stays VMEM-resident across the grid.
        return pl.BlockSpec(shape, lambda i: (0, 0))

    flops = 2 * M * (input_size * mid_cat + mid_cat * out_pad)
    bytes_accessed = x2d.size * 4 + weight_bytes + M * out_pad * 2
    cost = pl.CostEstimate(flops=flops, transcendentals=0,
                           bytes_accessed=bytes_accessed)

    out_pad_arr = pl.pallas_call(
        base_seq_model_kernel,
        out_shape=jax.ShapeDtypeStruct((M, out_pad), bf16),
        grid=grid,
        in_specs=[
            pl.BlockSpec((tile_m, input_size), lambda i: (i, 0)),
            resident(w_fold.shape), resident(b_fold.shape),
            resident(w2.shape), resident(b2.shape),
        ],
        out_specs=pl.BlockSpec((tile_m, out_pad), lambda i: (i, 0)),
        compiler_params=pltpu.CompilerParams(
            dimension_semantics=("parallel",),   # megacore sharding on v7x
            vmem_limit_bytes=_vmem_limit_bytes(tile_m, input_size, mid_cat,
                                               out_pad, weight_bytes),
        ),
        cost_estimate=cost,
    )(x2d, w_fold, b_fold, w2, b2)

    # Single slice of the useful columns, upcast once, then split heads.
    useful = out_pad_arr[:, :output_size + 2].astype(jnp.float32)
    state = useful[:, :output_size].reshape(B, S, output_size)
    acc = useful[:, output_size:].reshape(B, S, 2)
    return state, acc


def reference_forward_quantized(x, params, output_size):
    """Pure-JAX reference mirroring the kernel's folded, bf16-operand /
    f32-accumulate / bf16-output numerics (tight-tolerance check)."""
    f32 = jnp.float32
    q = lambda a: a.astype(jnp.bfloat16).astype(f32)
    B, S, input_size = x.shape
    mid_s = params["w_s1"].shape[1]
    w1cat = jnp.concatenate([params["w_s1"], params["w_a1"]], axis=1)
    b1cat = jnp.concatenate([params["b_s1"], params["b_a1"]], axis=1)
    w_fold = q(params["w_in"] @ w1cat)
    b_fold = params["b_in"] @ w1cat + b1cat
    x2d = x.reshape(B * S, input_size)
    z = _leaky_relu(q(x2d) @ w_fold + b_fold)
    state = q(q(z[:, :mid_s]) @ q(params["w_s2"]) + params["b_s2"])
    acc = q(q(z[:, mid_s:]) @ q(params["w_a2"]) + params["b_a2"])
    return state.reshape(B, S, output_size), acc.reshape(B, S, 2)


def reference_forward_f32(x, params, output_size):
    """Unfused full-f32 module math (loose-tolerance semantic check)."""
    h = x @ params["w_in"] + params["b_in"][0]
    s1 = _leaky_relu(h @ params["w_s1"] + params["b_s1"][0])
    state = s1 @ params["w_s2"] + params["b_s2"][0]
    a1 = _leaky_relu(h @ params["w_a1"] + params["b_a1"][0])
    acc = a1 @ params["w_a2"] + params["b_a2"][0]
    return state, acc


if __name__ == "__main__":
    # Small, module-consistent shapes.
    batch, seq = 2, 8
    input_size, hidden_size, output_size = 16, 32, 8

    key = jax.random.PRNGKey(0)
    k_x, k_p = jax.random.split(key)
    x = jax.random.normal(k_x, (batch, seq, input_size), jnp.float32)
    params = init_params(k_p, input_size, hidden_size, output_size)

    state_out, acc_out = base_seq_model_forward(x, params, output_size)
    state_out = jax.block_until_ready(state_out)
    acc_out = jax.block_until_ready(acc_out)

    assert state_out.shape == (batch, seq, output_size)
    assert acc_out.shape == (batch, seq, 2)

    # Tight check vs. a reference with identical (folded + bf16) quantization.
    ref_state_q, ref_acc_q = reference_forward_quantized(x, params, output_size)
    assert jnp.allclose(state_out, ref_state_q, atol=1e-2, rtol=1e-2)
    assert jnp.allclose(acc_out, ref_acc_q, atol=1e-2, rtol=1e-2)

    # Loose semantic check vs. the unfused full-f32 module math.
    ref_state, ref_acc = reference_forward_f32(x, params, output_size)
    assert jnp.allclose(state_out, ref_state, atol=1e-1, rtol=5e-2)
    assert jnp.allclose(acc_out, ref_acc, atol=1e-1, rtol=5e-2)

    print("KERNEL_OK")
</pallas_src>

<mosaic_0001>
module attributes {stable_mosaic.version = 11 : i64} {
  func.func @base_seq_model_kernel(%arg0: i32, %arg1: memref<8x16xf32, #tpu.memory_space<vmem>>, %arg2: memref<16x36xbf16, #tpu.memory_space<vmem>>, %arg3: memref<1x36xf32, #tpu.memory_space<vmem>>, %arg4: memref<36x128xbf16, #tpu.memory_space<vmem>>, %arg5: memref<1x128xf32, #tpu.memory_space<vmem>>, %arg6: memref<8x128xbf16, #tpu.memory_space<vmem>>) attributes {dimension_semantics = [#tpu.dimension_semantics<parallel>], iteration_bounds = array<i64: 2>, scalar_prefetch = 0 : i64, scratch_operands = 0 : i64, tpu.core_type = #tpu.core_type<tc>, window_params = [{transform_indices = @transform_0, window_bounds = array<i64: 8, 16>}, {pipeline_mode = #tpu.pipeline_mode<synchronous>, transform_indices = @transform_1, window_bounds = array<i64: 16, 36>}, {pipeline_mode = #tpu.pipeline_mode<synchronous>, transform_indices = @transform_2, window_bounds = array<i64: 1, 36>}, {pipeline_mode = #tpu.pipeline_mode<synchronous>, transform_indices = @transform_3, window_bounds = array<i64: 36, 128>}, {pipeline_mode = #tpu.pipeline_mode<synchronous>, transform_indices = @transform_4, window_bounds = array<i64: 1, 128>}, {transform_indices = @transform_5, window_bounds = array<i64: 8, 128>}]} {
    %c0 = arith.constant 0 : index
    %c0_0 = arith.constant 0 : index
    %0 = vector.load %arg1[%c0, %c0_0] : memref<8x16xf32, #tpu.memory_space<vmem>>, vector<8x16xf32>
    %1 = arith.truncf %0 : vector<8x16xf32> to vector<8x16xbf16>
    %c0_1 = arith.constant 0 : index
    %c0_2 = arith.constant 0 : index
    %2 = vector.load %arg2[%c0_1, %c0_2] : memref<16x36xbf16, #tpu.memory_space<vmem>>, vector<16x36xbf16>
    %cst = arith.constant dense<0.000000e+00> : vector<8x36xf32>
    %3 = tpu.matmul %1, %2, %cst {dimension_numbers = #tpu.dot_dimension_numbers<[1], [0], [0], [1], [0, 0, 1, 1], [], []>} : vector<8x16xbf16>, vector<16x36xbf16>, vector<8x36xf32> -> vector<8x36xf32>
    %c0_3 = arith.constant 0 : index
    %c0_4 = arith.constant 0 : index
    %4 = vector.load %arg3[%c0_3, %c0_4] : memref<1x36xf32, #tpu.memory_space<vmem>>, vector<1x36xf32>
    %5 = vector.broadcast %4 : vector<1x36xf32> to vector<8x36xf32>
    %6 = arith.addf %3, %5 : vector<8x36xf32>
    %cst_5 = arith.constant 0.000000e+00 : f32
    %7 = vector.broadcast %cst_5 : f32 to vector<8x36xf32>
    %8 = arith.cmpf ogt, %6, %7 : vector<8x36xf32>
    %cst_6 = arith.constant 0.00999999977 : f32
    %9 = vector.broadcast %cst_6 : f32 to vector<8x36xf32>
    %10 = arith.mulf %9, %6 : vector<8x36xf32>
    %11 = arith.select %8, %6, %10 : vector<8x36xi1>, vector<8x36xf32>
    %12 = arith.truncf %11 : vector<8x36xf32> to vector<8x36xbf16>
    %c0_7 = arith.constant 0 : index
    %c0_8 = arith.constant 0 : index
    %13 = vector.load %arg4[%c0_7, %c0_8] : memref<36x128xbf16, #tpu.memory_space<vmem>>, vector<36x128xbf16>
    %cst_9 = arith.constant dense<0.000000e+00> : vector<8x128xf32>
    %14 = tpu.matmul %12, %13, %cst_9 {dimension_numbers = #tpu.dot_dimension_numbers<[1], [0], [0], [1], [0, 0, 1, 1], [], []>} : vector<8x36xbf16>, vector<36x128xbf16>, vector<8x128xf32> -> vector<8x128xf32>
    %c0_10 = arith.constant 0 : index
    %c0_11 = arith.constant 0 : index
    %15 = vector.load %arg5[%c0_10, %c0_11] : memref<1x128xf32, #tpu.memory_space<vmem>>, vector<1x128xf32>
    %16 = vector.broadcast %15 : vector<1x128xf32> to vector<8x128xf32>
    %17 = arith.addf %14, %16 : vector<8x128xf32>
    %18 = arith.truncf %17 : vector<8x128xf32> to vector<8x128xbf16>
    %c0_12 = arith.constant 0 : index
    %c0_13 = arith.constant 0 : index
    %19 = vector.load %arg6[%c0_12, %c0_13] : memref<8x128xbf16, #tpu.memory_space<vmem>>, vector<8x128xbf16>
    tpu.vector_store %arg6[%c0_12, %c0_13], %18 {strides = array<i32>} : memref<8x128xbf16, #tpu.memory_space<vmem>>, vector<8x128xbf16>,
    return
  }
  func.func @transform_0(%arg0: i32) -> (i32, i32) {
    %c0_i32 = arith.constant 0 : i32
    %c0_i32_0 = arith.constant 0 : i32
    return %arg0, %c0_i32 : i32, i32
  }
  func.func @transform_1(%arg0: i32) -> (i32, i32) {
    %c0_i32 = arith.constant 0 : i32
    %c0_i32_0 = arith.constant 0 : i32
    %c0_i32_1 = arith.constant 0 : i32
    return %c0_i32, %c0_i32_0 : i32, i32
  }
  func.func @transform_2(%arg0: i32) -> (i32, i32) {
    %c0_i32 = arith.constant 0 : i32
    %c0_i32_0 = arith.constant 0 : i32
    %c0_i32_1 = arith.constant 0 : i32
    return %c0_i32, %c0_i32_0 : i32, i32
  }
  func.func @transform_3(%arg0: i32) -> (i32, i32) {
    %c0_i32 = arith.constant 0 : i32
    %c0_i32_0 = arith.constant 0 : i32
    %c0_i32_1 = arith.constant 0 : i32
    return %c0_i32, %c0_i32_0 : i32, i32
  }
  func.func @transform_4(%arg0: i32) -> (i32, i32) {
    %c0_i32 = arith.constant 0 : i32
    %c0_i32_0 = arith.constant 0 : i32
    %c0_i32_1 = arith.constant 0 : i32
    return %c0_i32, %c0_i32_0 : i32, i32
  }
  func.func @transform_5(%arg0: i32) -> (i32, i32) {
    %c0_i32 = arith.constant 0 : i32
    %c0_i32_0 = arith.constant 0 : i32
    return %arg0, %c0_i32 : i32, i32
  }
}

</mosaic_0001>

<llo_original>
// kernel: tpu_custom_call.1
$region0: #{tpu_custom_call.1}
  #allocation0 [shape = 'u32[]', space=smem, size = 0x4, offset = 0x4, fixed_abs, tag = 'smem constant byte address 0x4 - core index']
  #allocation1 [shape = 'u32[72,128]{1,0:T(1,128)}', space=vmem, size = 0x9000, scoped, tag = 'internal scratch']
  %s0 = inlined_call_operand.hbm [shape: f32[16,16], index: 0, kind: input, shape index: {}]
  %s1 = inlined_call_operand.hbm [shape: bf16[16,36], index: 1, kind: input, shape index: {}]
  %s2 = inlined_call_operand.vmem [shape: f32[1,36], index: 2, kind: input, shape index: {}]
  %s3 = inlined_call_operand.hbm [shape: bf16[36,128], index: 3, kind: input, shape index: {}]
  %s4 = inlined_call_operand.vmem [shape: f32[1,128], index: 4, kind: input, shape index: {}]
  %s5 = inlined_call_operand.hbm [shape: bf16[16,128], index: 5, kind: output, shape index: {}]
  %s6 = sld [smem:[#allocation0]]
  $region65: #{tpu_custom_call.1} parent=0
    _
  %s8 = ssub.s32 1, %s6
  %s9 = scalar_select 0, %s8, %s6
  $region1: #{tpu_custom_call.1} parent=0
    #allocation2 [shape = 'u8[8192]{0}', space=vmem, size = 0x2000, scoped, tag = 'input window, operand 0']
    #allocation3 [shape = 's32[2]{0}', space=sflag, size = 0x8, scoped, tag = 'scoped memory for tpu_custom_call.1']
    #allocation4 [shape = 's32[2]{0}', space=sflag, size = 0x8, scoped, tag = 'scoped memory for tpu_custom_call.1']
    #allocation5 [shape = 'u8[4096]{0}', space=vmem, size = 0x1000, scoped, tag = 'input window, operand 1, single buffered']
    #allocation6 [shape = 's32[1]{0}', space=sflag, size = 0x4, scoped, tag = 'scoped memory for tpu_custom_call.1']
    #allocation7 [shape = 'u8[10240]{0}', space=vmem, size = 0x2800, scoped, tag = 'input window, operand 3, single buffered']
    #allocation8 [shape = 'u8[4096]{0}', space=vmem, size = 0x1000, scoped, tag = 'output window, operand 0']
    %10 = vsyncpa [#allocation3], 0
    %s11 = scalar_lea.sflag [#allocation3], 1
    %12 = vsyncpa %s11, 0
    %13 = vsyncpa [#allocation6], 0
    %14 = vsyncpa [#allocation4], 0
    %s15 = scalar_lea.sflag [#allocation4], 1
    %16 = vsyncpa %s15, 0
    loop: start=0, step=1, limit=4
    $region2: #{tpu_custom_call.1} parent=1 // loop_pre_header
      _
    $region3: #{tpu_custom_call.1} parent=1 // loop_header
      %s18 = sphi 0, %s22
      %p19 = scmp.ge.s32.totalorder %s18, 4
      %s28 = sphi 0, %s30
      %s31 = sphi 0, %s28
      %s32 = sphi 0, %s31
      %s48 = sphi 0, %s32
      %s52 = sphi 0, %s52
      %s54 = sphi 0, %s52
      %s55 = sphi 0, %s54
      %s69 = sphi 0, %s55
      %s73 = sphi 0, %s73
      %s75 = sphi 0, %s73
      %s76 = sphi 0, %s75
      %s90 = sphi 0, %s76
      %s94 = sphi 0, %s94
      %s96 = sphi 0, %s94
      %s97 = sphi 0, %s96
      %s111 = sphi 0, %s97
      %s115 = sphi 0, %s115
      %s117 = sphi 0, %s115
      %s118 = sphi 0, %s117
      %s132 = sphi 0, %s118
      %s138 = sphi 0, %s140
      %s141 = sphi 0, %s138
      %s142 = sphi 0, %s141
      %s158 = sphi 0, %s142
    $region4: #{tpu_custom_call.1} parent=1 // loop_header_branch
      %21 = sbr.rel (%p19) target = $region8
    $region5: #{tpu_custom_call.1} parent=1 // loop_body
      %s23 = ssub.s32 %s18, 1
      %s24 = ssub.s32 %s18, 2
      %s25 = sadd.s32 %s18, 1
      %s26 = ssub.s32 %s18, %s25
      %p27 = scmp.eq.s32.totalorder %s26, 0
      %s29 = sadd.s32 %s28, 1
      %s30 = scalar_select %p27, %s28, %s29
      %p33 = pneg %p27
      %p34 = scmp.eq.s32.totalorder %s18, 1
      %p35 = por %p33, %p34
      %p36 = scmp.ne.s32.totalorder %s28, %s31
      %p37 = scmp.eq.s32.totalorder %s18, 0
      %p38 = por %p36, %p37
      %p39 = scmp.ne.s32.totalorder %s28, %s31
      %p40 = scmp.eq.s32.totalorder %s23, 1
      %p41 = por %p39, %p40
      %p42 = scmp.ne.s32.totalorder %s31, %s32
      %p43 = scmp.eq.s32.totalorder %s23, 0
      %p44 = por %p42, %p43
      %p45 = scmp.ne.s32.totalorder %s31, %s32
      %p46 = scmp.eq.s32.totalorder %s24, 1
      %p47 = por %p45, %p46
      %p49 = scmp.ne.s32.totalorder %s32, %s48
      %p50 = scmp.eq.s32.totalorder %s24, 0
      %p51 = por %p49, %p50
      %s53 = sadd.s32 %s52, 1
      %p56 = scmp.eq.s32.totalorder %s18, 1
      %p57 = scmp.ne.s32.totalorder %s52, %s54
      %p58 = scmp.eq.s32.totalorder %s18, 0
      %p59 = por %p57, %p58
      %p60 = scmp.ne.s32.totalorder %s52, %s54
      %p61 = scmp.eq.s32.totalorder %s23, 1
      %p62 = por %p60, %p61
      %p63 = scmp.ne.s32.totalorder %s54, %s55
      %p64 = scmp.eq.s32.totalorder %s23, 0
      %p65 = por %p63, %p64
      %p66 = scmp.ne.s32.totalorder %s54, %s55
      %p67 = scmp.eq.s32.totalorder %s24, 1
      %p68 = por %p66, %p67
      %p70 = scmp.ne.s32.totalorder %s55, %s69
      %p71 = scmp.eq.s32.totalorder %s24, 0
      %p72 = por %p70, %p71
      %s74 = sadd.s32 %s73, 1
      %p77 = scmp.eq.s32.totalorder %s18, 1
      %p78 = scmp.ne.s32.totalorder %s73, %s75
      %p79 = scmp.eq.s32.totalorder %s18, 0
      %p80 = por %p78, %p79
      %p81 = scmp.ne.s32.totalorder %s73, %s75
      %p82 = scmp.eq.s32.totalorder %s23, 1
      %p83 = por %p81, %p82
      %p84 = scmp.ne.s32.totalorder %s75, %s76
      %p85 = scmp.eq.s32.totalorder %s23, 0
      %p86 = por %p84, %p85
      %p87 = scmp.ne.s32.totalorder %s75, %s76
      %p88 = scmp.eq.s32.totalorder %s24, 1
      %p89 = por %p87, %p88
      %p91 = scmp.ne.s32.totalorder %s76, %s90
      %p92 = scmp.eq.s32.totalorder %s24, 0
      %p93 = por %p91, %p92
      %s95 = sadd.s32 %s94, 1
      %p98 = scmp.eq.s32.totalorder %s18, 1
      %p99 = scmp.ne.s32.totalorder %s94, %s96
      %p100 = scmp.eq.s32.totalorder %s18, 0
      %p101 = por %p99, %p100
      %p102 = scmp.ne.s32.totalorder %s94, %s96
      %p103 = scmp.eq.s32.totalorder %s23, 1
      %p104 = por %p102, %p103
      %p105 = scmp.ne.s32.totalorder %s96, %s97
      %p106 = scmp.eq.s32.totalorder %s23, 0
      %p107 = por %p105, %p106
      %p108 = scmp.ne.s32.totalorder %s96, %s97
      %p109 = scmp.eq.s32.totalorder %s24, 1
      %p110 = por %p108, %p109
      %p112 = scmp.ne.s32.totalorder %s97, %s111
      %p113 = scmp.eq.s32.totalorder %s24, 0
      %p114 = por %p112, %p113
      %s116 = sadd.s32 %s115, 1
      %p119 = scmp.eq.s32.totalorder %s18, 1
      %p120 = scmp.ne.s32.totalorder %s115, %s117
      %p121 = scmp.eq.s32.totalorder %s18, 0
      %p122 = por %p120, %p121
      %p123 = scmp.ne.s32.totalorder %s115, %s117
      %p124 = scmp.eq.s32.totalorder %s23, 1
      %p125 = por %p123, %p124
      %p126 = scmp.ne.s32.totalorder %s117, %s118
      %p127 = scmp.eq.s32.totalorder %s23, 0
      %p128 = por %p126, %p127
      %p129 = scmp.ne.s32.totalorder %s117, %s118
      %p130 = scmp.eq.s32.totalorder %s24, 1
      %p131 = por %p129, %p130
      %p133 = scmp.ne.s32.totalorder %s118, %s132
      %p134 = scmp.eq.s32.totalorder %s24, 0
      %p135 = por %p133, %p134
      %s136 = ssub.s32 %s18, %s25
      %p137 = scmp.eq.s32.totalorder %s136, 0
      %s139 = sadd.s32 %s138, 1
      %s140 = scalar_select %p137, %s138, %s139
      %p143 = pneg %p137
      %p144 = scmp.eq.s32.totalorder %s18, 1
      %p145 = por %p143, %p144
      %p146 = scmp.ne.s32.totalorder %s138, %s141
      %p147 = scmp.eq.s32.totalorder %s18, 0
      %p148 = por %p146, %p147
      %p149 = scmp.ne.s32.totalorder %s138, %s141
      %p150 = scmp.eq.s32.totalorder %s23, 1
      %p151 = por %p149, %p150
      %p152 = scmp.ne.s32.totalorder %s141, %s142
      %p153 = scmp.eq.s32.totalorder %s23, 0
      %p154 = por %p152, %p153
      %p155 = scmp.ne.s32.totalorder %s141, %s142
      %p156 = scmp.eq.s32.totalorder %s24, 1
      %p157 = por %p155, %p156
      %p159 = scmp.ne.s32.totalorder %s142, %s158
      %p160 = scmp.eq.s32.totalorder %s24, 0
      %p161 = por %p159, %p160
      %p162 = scmp.le.s32.totalorder 1, %s18
      %p163 = scmp.lt.s32.totalorder %s18, 3
      %p164 = pnand %p162, %p163
      %p165 = pneg %p164
      // Predicated region
      $region9: #{tpu_custom_call.1} parent=5 // pred_check
        _
      $region10: #{tpu_custom_call.1} parent=5 // pred_check_branch
        %167 = sbr.rel (%p164) target = $region12
      $region11: #{tpu_custom_call.1} parent=5 // pred_region
        %s168 = ssub.s32 %s18, 1
        // Predicated region
        $region13: #{tpu_custom_call.1} parent=11 // pred_check
          %p169 = pneg %p65
        $region14: #{tpu_custom_call.1} parent=11 // pred_check_branch
          %171 = sbr.rel (%p169) target = $region16
        $region15: #{tpu_custom_call.1} parent=11 // pred_region
          %173 = vsyncadd [#allocation6], 0
          %s174 = sshll.u32 %s1, 4
          %s175 = int_to_ptr.hbm [resolvable:$true] %s174
          %s176 = sshll.u32 [#allocation5], 4
          %s177 = int_to_ptr.vmem [resolvable:$true] %s176
          %182 = dma.hbm_to_vmem [thread:$0]  %s175, 128, %s177, [#allocation6], 64, 64, 4
        $region16: #{tpu_custom_call.1} parent=11 // pred_fallthru
          _
        // Predicated region
        $region17: #{tpu_custom_call.1} parent=11 // pred_check
          %p183 = pneg %p86
        $region18: #{tpu_custom_call.1} parent=11 // pred_check_branch
          %185 = sbr.rel (%p183) target = $region20
        $region19: #{tpu_custom_call.1} parent=11 // pred_region
          _
        $region20: #{tpu_custom_call.1} parent=11 // pred_fallthru
          _
        // Predicated region
        $region21: #{tpu_custom_call.1} parent=11 // pred_check
          %p186 = pneg %p107
        $region22: #{tpu_custom_call.1} parent=11 // pred_check_branch
          %188 = sbr.rel (%p186) target = $region24
        $region23: #{tpu_custom_call.1} parent=11 // pred_region
          %190 = vsyncadd [#allocation6], 0
          %s191 = sshll.u32 %s3, 4
          %s192 = int_to_ptr.hbm [resolvable:$true] %s191
          %s193 = sshll.u32 [#allocation7], 4
          %s194 = int_to_ptr.vmem [resolvable:$true] %s193
          %199 = dma.hbm_to_vmem [thread:$0]  %s192, 320, %s194, [#allocation6], 64, 64, 4
        $region24: #{tpu_custom_call.1} parent=11 // pred_fallthru
          _
        // Predicated region
        $region25: #{tpu_custom_call.1} parent=11 // pred_check
          %p200 = pneg %p128
        $region26: #{tpu_custom_call.1} parent=11 // pred_check_branch
          %202 = sbr.rel (%p200) target = $region28
        $region27: #{tpu_custom_call.1} parent=11 // pred_region
          _
        $region28: #{tpu_custom_call.1} parent=11 // pred_fallthru
          _
      $region12: #{tpu_custom_call.1} parent=5 // pred_fallthru
        _
      %p203 = scmp.lt.s32.totalorder %s18, 2
      // Predicated region
      $region29: #{tpu_custom_call.1} parent=5 // pred_check
        %p204 = pneg %p203
      $region30: #{tpu_custom_call.1} parent=5 // pred_check_branch
        %206 = sbr.rel (%p204) target = $region32
      $region31: #{tpu_custom_call.1} parent=5 // pred_region
        // Predicated region
        $region33: #{tpu_custom_call.1} parent=31 // pred_check
          %p207 = pneg %p38
        $region34: #{tpu_custom_call.1} parent=31 // pred_check_branch
          %209 = sbr.rel (%p207) target = $region36
        $region35: #{tpu_custom_call.1} parent=31 // pred_region
          %s210 = sand.u32 %s28, 1
          %s211 = scalar_lea.sflag [#allocation3], %s210
          %s212 = sand.u32 %s28, 1
          %s213 = smul.addr %s212, 8
          %s214 = scalar_lea.vmem [#allocation2], %s213
          %216 = vsyncadd %s211, 0
          %s217 = smul.addr %s18, 8
          %s218 = scalar_lea.hbm %s0, %s217
          %s220 = sshll.u32 %s218, 4
          %s221 = int_to_ptr.hbm [resolvable:$true] %s220
          %s222 = sshll.u32 %s214, 4
          %s223 = int_to_ptr.vmem [resolvable:$true] %s222
          %225 = dma.hbm_to_vmem [thread:$0]  %s221, 128, %s223, %s211
        $region36: #{tpu_custom_call.1} parent=31 // pred_fallthru
          _
      $region32: #{tpu_custom_call.1} parent=5 // pred_fallthru
        _
      %p226 = scmp.le.s32.totalorder 1, %s18
      %p227 = scmp.lt.s32.totalorder %s18, 3
      %p228 = pnand %p226, %p227
      %p229 = pneg %p228
      // Predicated region
      $region37: #{tpu_custom_call.1} parent=5 // pred_check
        _
      $region38: #{tpu_custom_call.1} parent=5 // pred_check_branch
        %231 = sbr.rel (%p228) target = $region40
      $region39: #{tpu_custom_call.1} parent=5 // pred_region
        %s232 = ssub.s32 %s18, 1
        %s233 = sand.u32 %s31, 1
        %s234 = scalar_lea.sflag [#allocation3], %s233
        %s235 = sand.u32 %s31, 1
        %s236 = smul.addr %s235, 8
        %s237 = scalar_lea.vmem [#allocation2], %s236
        // Predicated region
        $region41: #{tpu_custom_call.1} parent=39 // pred_check
          %p238 = pneg %p44
        $region42: #{tpu_custom_call.1} parent=39 // pred_check_branch
          %240 = sbr.rel (%p238) target = $region44
        $region43: #{tpu_custom_call.1} parent=39 // pred_region
          %242 = dma.done %s234, 128
        $region44: #{tpu_custom_call.1} parent=39 // pred_fallthru
          _
        // Predicated region
        $region45: #{tpu_custom_call.1} parent=39 // pred_check
          %p243 = pneg %p65
        $region46: #{tpu_custom_call.1} parent=39 // pred_check_branch
          %245 = sbr.rel (%p243) target = $region48
        $region47: #{tpu_custom_call.1} parent=39 // pred_region
          %247 = dma.done [#allocation6], 128
        $region48: #{tpu_custom_call.1} parent=39 // pred_fallthru
          _
        // Predicated region
        $region49: #{tpu_custom_call.1} parent=39 // pred_check
          %p248 = pneg %p107
        $region50: #{tpu_custom_call.1} parent=39 // pred_check_branch
          %250 = sbr.rel (%p248) target = $region52
        $region51: #{tpu_custom_call.1} parent=39 // pred_region
          %252 = dma.done [#allocation6], 320
        $region52: #{tpu_custom_call.1} parent=39 // pred_fallthru
          _
        %s253 = sand.u32 %s31, 1
        %s254 = scalar_lea.sflag [#allocation3], %s253
        %s255 = sand.u32 %s31, 1
        %s256 = smul.addr %s255, 8
        %s257 = scalar_lea.vmem [#allocation2], %s256
        %p258 = pneg %p44
        %p259 = pneg %p41
        %p260 = pneg %p65
        %p261 = pneg %p62
        %p262 = pneg %p86
        %p263 = pneg %p83
        %p264 = pneg %p107
        %p265 = pneg %p104
        %p266 = pneg %p128
        %p267 = pneg %p125
        %p268 = pneg %p154
        %p269 = pneg %p151
        %s270 = sand.u32 %s141, 1
        %s271 = scalar_lea.sflag [#allocation4], %s270
        %s272 = sand.u32 %s141, 1
        %s273 = smul.addr %s272, 4
        %s274 = scalar_lea.vmem [#allocation8], %s273
        %v276 = vld [vmem:[%s237] sm:$0xff]
        %v277 = vpack.c.bf16 %v276, %v276
        %v278 = vld [vmem:[#allocation5] sm:$0xf]
        %v279 = vld [vmem:[#allocation5 + $0x4] sm:$0xf]
        %v280 = vld [vmem:[%s2] sm:$0x1]
        %v282 = vperm.slane %v280, 0
        %v286 = vunpack.c.l.b16 %v278
        %v287 = vunpack.c.l.b16 %v279
        %v288 = vpack.c.b16 %v287, %v286
        %vm290 = vcmask 130048
        %v292 = vsel %vm290, %v277, 0
        %294 = vmatpush.bf16.msra.mxu0 0
        %295 = vmatpush.bf16.msra.mxu0 0
        %296 = vmatpush.bf16.msra.mxu0 0
        %297 = vmatpush.bf16.msra.mxu0 0
        %298 = vmatpush.bf16.msra.mxu0 0
        %299 = vmatpush.bf16.msra.mxu0 0
        %300 = vmatpush.bf16.msra.mxu0 0
        %301 = vmatpush.bf16.msra.mxu0 %v288
        %302 = vmatmul.bf16.gmra.mxu0 %v292
        %v303 = vpop.f32.mrf.mxu0
        %v304 = vadd.f32 %v282, %v303
        %v305 = vpop.f32.mrf.mxu0
        %306 = vdwg.mxu0
        %vm307 = vcmp.gt.f32.partialorder %v304, 0.0
        %v308 = vmul.f32 %v304, 0.01
        %v309 = vsel %vm307, %v304, %v308
        %v310 = vpack.c.bf16 %v309, %v309
        %v311 = vld [vmem:[#allocation7] sm:$0xf]
        %v312 = vld [vmem:[#allocation7 + $0x4] sm:$0xf]
        %v313 = vld [vmem:[#allocation7 + $0x8] sm:$0xf]
        %v314 = vld [vmem:[#allocation7 + $0xc] sm:$0xf]
        %v315 = vld [vmem:[#allocation7 + $0x10] sm:$0x3]
        %v316 = vld [vmem:[%s4] sm:$0x1]
        %v318 = vperm.slane %v316, 0
        %v325 = vunpack.c.l.b16 %v311
        %v326 = vunpack.c.l.b16 %v312
        %v327 = vunpack.c.l.b16 %v313
        %v328 = vunpack.c.l.b16 %v314
        %v329 = vunpack.c.l.b16 %v315
        %v330 = vpack.c.b16 %v326, %v325
        %v331 = vpack.c.b16 %v328, %v327
        %v332 = vpack.c.b16 %v329, %v329
        %vm335 = vcmask 293888
        %v337 = vsel %vm335, %v310, 0
        %vm339 = vcmask 1041408
        %v341 = vsel %vm339, %v332, 0
        %343 = vmatpush.bf16.msra.mxu0 0
        %344 = vmatpush.bf16.msra.mxu0 0
        %345 = vmatpush.bf16.msra.mxu0 0
        %346 = vmatpush.bf16.msra.mxu0 0
        %347 = vmatpush.bf16.msra.mxu0 0
        %348 = vmatpush.bf16.msra.mxu0 %v341
        %349 = vmatpush.bf16.msra.mxu0 %v331
        %350 = vmatpush.bf16.msra.mxu0 %v330
        %351 = vmatmul.bf16.gmra.mxu0 %v337
        %v352 = vpop.f32.mrf.mxu0
        %v353 = vadd.f32 %v318, %v352
        %v354 = vpop.f32.mrf.mxu0
        %355 = vdwg.mxu0
        %v356 = vpack.c.bf16 %v353, %v353
        %357 = vst [vmem:[%s274] sm:$0xf] %v356
        %s358 = sand.u32 %s141, 1
        %s359 = scalar_lea.sflag [#allocation4], %s358
        %s360 = sand.u32 %s141, 1
        %s361 = smul.addr %s360, 4
        %s362 = scalar_lea.vmem [#allocation8], %s361
        // Predicated region
        $region53: #{tpu_custom_call.1} parent=39 // pred_check
          %p363 = pneg %p151
        $region54: #{tpu_custom_call.1} parent=39 // pred_check_branch
          %365 = sbr.rel (%p363) target = $region56
        $region55: #{tpu_custom_call.1} parent=39 // pred_region
          %367 = vsyncadd %s359, 0
          %s368 = smul.addr %s23, 4
          %s369 = scalar_lea.hbm %s5, %s368
          %s371 = sshll.u32 %s362, 4
          %s372 = int_to_ptr.vmem [resolvable:$true] %s371
          %s373 = sshll.u32 %s369, 4
          %s374 = int_to_ptr.hbm [resolvable:$true] %s373
          %376 = dma.vmem_to_hbm [thread:$0]  %s372, 64, %s374, %s359
        $region56: #{tpu_custom_call.1} parent=39 // pred_fallthru
          _
      $region40: #{tpu_custom_call.1} parent=5 // pred_fallthru
        _
      %p377 = scmp.le.s32.totalorder 2, %s18
      // Predicated region
      $region57: #{tpu_custom_call.1} parent=5 // pred_check
        %p378 = pneg %p377
      $region58: #{tpu_custom_call.1} parent=5 // pred_check_branch
        %380 = sbr.rel (%p378) target = $region60
      $region59: #{tpu_custom_call.1} parent=5 // pred_region
        %s381 = ssub.s32 %s18, 2
        // Predicated region
        $region61: #{tpu_custom_call.1} parent=59 // pred_check
          %p382 = pneg %p157
        $region62: #{tpu_custom_call.1} parent=59 // pred_check_branch
          %384 = sbr.rel (%p382) target = $region64
        $region63: #{tpu_custom_call.1} parent=59 // pred_region
          %s385 = sand.u32 %s142, 1
          %s386 = scalar_lea.sflag [#allocation4], %s385
          %s387 = sand.u32 %s142, 1
          %s388 = smul.addr %s387, 4
          %s389 = scalar_lea.vmem [#allocation8], %s388
          %391 = dma.done %s386, 64
        $region64: #{tpu_custom_call.1} parent=59 // pred_fallthru
          _
      $region60: #{tpu_custom_call.1} parent=5 // pred_fallthru
        _
    $region6: #{tpu_custom_call.1} parent=1 // loop_footer
      %s22 = sadd.s32 1, %s18
    $region7: #{tpu_custom_call.1} parent=1 // loop_footer_branch
      %17 = sbr.rel target = $region3
    $region8: #{tpu_custom_call.1} parent=1 // loop_exit
      _
    %392 = vsyncpa [#allocation3], 1
    %s393 = scalar_lea.sflag [#allocation3], 1
    %394 = vsyncpa %s393, 1
    %395 = vsyncpa [#allocation6], 1
    %396 = vsyncpa [#allocation4], 1
    %s397 = scalar_lea.sflag [#allocation4], 1
    %398 = vsyncpa %s397, 1

</llo_original>
